<compile_context>
chip_gen: v7x
topology: tpu7x:2x2x1
jax: 0.10.0
libtpu: 0.0.40
codegen_flags: <defaults>
</compile_context>

<pallas_src>
import functools

import jax
import jax.numpy as jnp
from jax.experimental import pallas as pl
from jax.experimental.pallas import tpu as pltpu


def _round_up(x, m):
    return ((x + m - 1) // m) * m


# ---------------------------------------------------------------------------
# Kernel: one batch tile of the discriminator head.
#   h_ref:      (TB, Hp)     pooled representation, bf16, lane-padded
#   w_hbm:      (L, Hp, Hp)  hidden-layer weights, bf16, stored (in, out), in HBM
#   b_hbm:      (L, 1, Hp)   hidden-layer biases, f32, in HBM
#   wl_hbm:     (Hp, CP)     logit weight, bf16, in HBM
#   bl_hbm:     (1, CP)      logit bias, f32, in HBM
#   rep_ref:    (TB, Hp)     last_rep output (f32; padded lanes are 0)
#   logits_ref: (TB, CP)     logits output (padded lanes sliced off outside)
#   probs_ref:  (TB, CP)     softmax probs (padded lanes are exactly 0)
# Weights are copied once into single-buffered VMEM scratch at grid step 0;
# scratch persists across grid steps, so resident weights never cost 2x VMEM.
# ---------------------------------------------------------------------------
def _disc_head_kernel(h_ref, w_hbm, b_hbm, wl_hbm, bl_hbm,
                      rep_ref, logits_ref, probs_ref,
                      w_vmem, b_vmem, wl_vmem, bl_vmem,
                      *, num_layers, slope, num_classes):
    @pl.when(pl.program_id(0) == 0)
    def _load_weights():
        pltpu.sync_copy(w_hbm, w_vmem)
        pltpu.sync_copy(b_hbm, b_vmem)
        pltpu.sync_copy(wl_hbm, wl_vmem)
        pltpu.sync_copy(bl_hbm, bl_vmem)

    # input_dropout / per-layer Dropout: identity in inference (eval) mode.
    x = h_ref[...]                                              # (TB, Hp) bf16
    for l in range(num_layers):                                 # static unroll
        y = jnp.dot(x.astype(jnp.bfloat16), w_vmem[l],
                    preferred_element_type=jnp.float32) + b_vmem[l]
        x = jnp.maximum(y, slope * y)                           # LeakyReLU(0.2)
    rep_ref[...] = x.astype(rep_ref.dtype)

    logits = jnp.dot(x.astype(jnp.bfloat16), wl_vmem[...],
                     preferred_element_type=jnp.float32) + bl_vmem[...]
    logits_ref[...] = logits.astype(logits_ref.dtype)

    # Softmax over the real classes only; padded lanes -> -inf -> prob exactly 0.
    lane = jax.lax.broadcasted_iota(jnp.int32, logits.shape, dimension=1)
    masked = jnp.where(lane < num_classes, logits, -jnp.inf)
    m = jnp.max(masked, axis=-1, keepdims=True)
    e = jnp.exp(masked - m)
    denom = jnp.sum(e, axis=-1, keepdims=True)
    probs_ref[...] = (e / denom).astype(probs_ref.dtype)        # exact normalization


# ---------------------------------------------------------------------------
# VMEM budgeting and batch tiling.
# ---------------------------------------------------------------------------
def _weight_vmem_bytes(L, Hp, CP):
    # Single-buffered resident weights (bias tiles pad to 8 sublanes in VMEM).
    return L * Hp * Hp * 2 + L * 8 * Hp * 4 + Hp * CP * 2 + 8 * CP * 4


def _tile_vmem_bytes(tb, Hp, CP):
    # Double-buffered per-grid-step tiles: bf16 hidden in, f32 rep/logits/probs out.
    return 2 * tb * Hp * 2 + 2 * tb * (Hp + 2 * CP) * 4


def _pick_batch_tile(B, Hp, CP, L, budget=40 << 20):
    # Prefer a single grid step: grid steps execute sequentially on one
    # TensorCore (v5e/v6e) and each costs ~0.35us; only tile when the
    # activations would blow the VMEM budget.
    if _weight_vmem_bytes(L, Hp, CP) + _tile_vmem_bytes(B, Hp, CP) <= budget:
        return B
    for t in (4096, 2048, 1024, 512, 256, 128, 64, 32, 16, 8):
        if t < B and B % t == 0 and \
           _weight_vmem_bytes(L, Hp, CP) + _tile_vmem_bytes(t, Hp, CP) <= budget:
            return t
    return 8 if B % 8 == 0 else B


def _vmem_limit(L, Hp, CP, tb):
    footprint = _weight_vmem_bytes(L, Hp, CP) + _tile_vmem_bytes(tb, Hp, CP)
    # ~25% headroom + compiler internal scratch; cap at 48 MiB (v7x physical
    # VMEM per TC is only 64 MiB), floor at 16 MiB (safe on all generations).
    return int(max(16 << 20, min(48 << 20, footprint * 5 // 4 + (4 << 20))))


@functools.lru_cache(maxsize=None)
def _build_head_call(B, Hp, CP, L, tb, num_classes, vmem_limit_bytes):
    kernel = functools.partial(_disc_head_kernel, num_layers=L, slope=0.2,
                               num_classes=num_classes)
    hbm = pl.BlockSpec(memory_space=pl.ANY)           # resident weights stay in HBM
    in_specs = [
        pl.BlockSpec((tb, Hp), lambda i: (i, 0)),     # hidden, tiled over batch
        hbm, hbm, hbm, hbm,
    ]
    out_specs = (
        pl.BlockSpec((tb, Hp), lambda i: (i, 0)),
        pl.BlockSpec((tb, CP), lambda i: (i, 0)),
        pl.BlockSpec((tb, CP), lambda i: (i, 0)),
    )
    out_shapes = (
        jax.ShapeDtypeStruct((B, Hp), jnp.float32),   # last_rep (lane-padded)
        jax.ShapeDtypeStruct((B, CP), jnp.float32),   # logits   (lane-padded)
        jax.ShapeDtypeStruct((B, CP), jnp.float32),   # probs    (lane-padded)
    )
    scratch = [
        pltpu.VMEM((L, Hp, Hp), jnp.bfloat16),        # resident layer weights
        pltpu.VMEM((L, 1, Hp), jnp.float32),          # resident layer biases
        pltpu.VMEM((Hp, CP), jnp.bfloat16),           # resident logit weight
        pltpu.VMEM((1, CP), jnp.float32),             # resident logit bias
    ]
    # TODO(synk): on v7x the batch axis could be split across the two
    # TensorCores with pltpu.CORE_PARALLEL (needs per-core weight staging);
    # kept sequential ("arbitrary") so the step-0 weight copy is valid on
    # every chip generation.
    return pl.pallas_call(
        kernel,
        out_shape=out_shapes,
        grid_spec=pltpu.PrefetchScalarGridSpec(
            num_scalar_prefetch=0,
            grid=(B // tb,),
            in_specs=in_specs,
            out_specs=out_specs,
            scratch_shapes=scratch,
        ),
        compiler_params=pltpu.CompilerParams(
            dimension_semantics=("arbitrary",),
            vmem_limit_bytes=vmem_limit_bytes,
        ),
    )


# ---------------------------------------------------------------------------
# One-time (model-load) weight preparation — hoisted out of the forward path.
# ---------------------------------------------------------------------------
def prepare_discriminator_params(w, b, wl, bl):
    """w: [L,H,H] stored (in,out); b: [L,1,H] (or [L,H]); wl: [H,C]; bl: [1,C] (or [C]).

    Returns bf16/f32 weights zero-padded to lane-dense (128-multiple) dims.
    """
    L, H, _ = w.shape
    C = wl.shape[-1]
    Hp = max(128, _round_up(H, 128))
    CP = max(128, _round_up(C, 128))
    w_p = jnp.zeros((L, Hp, Hp), jnp.bfloat16).at[:, :H, :H].set(w.astype(jnp.bfloat16))
    b_p = jnp.zeros((L, 1, Hp), jnp.float32).at[:, :, :H].set(
        jnp.reshape(b.astype(jnp.float32), (L, 1, H)))
    wl_p = jnp.zeros((Hp, CP), jnp.bfloat16).at[:H, :C].set(wl.astype(jnp.bfloat16))
    bl_p = jnp.zeros((1, CP), jnp.float32).at[:, :C].set(
        jnp.reshape(bl.astype(jnp.float32), (1, C)))
    return w_p, b_p, wl_p, bl_p


def bert_discriminator_head(hidden, w_p, b_p, wl_p, bl_p, *,
                            hidden_size, num_classes, tb=None,
                            vmem_limit_bytes=None):
    """hidden: [B, H] float. Weights must come from prepare_discriminator_params.

    Returns (last_rep [B,H] f32, logits [B,C] f32, probs [B,C] f32).
    """
    B, H = hidden.shape
    L, Hp, _ = w_p.shape
    CP = wl_p.shape[-1]
    assert H == hidden_size and L >= 1
    if tb is None:
        tb = _pick_batch_tile(B, Hp, CP, L)
    assert B % tb == 0, (B, tb)
    assert tb == B or tb % 8 == 0, "batch tile must be sublane-aligned"
    if vmem_limit_bytes is None:
        vmem_limit_bytes = _vmem_limit(L, Hp, CP, tb)

    # bf16, lane-dense hidden input: halves the only per-grid-step HBM read.
    if H == Hp:
        h_p = hidden.astype(jnp.bfloat16)
    else:
        h_p = jnp.zeros((B, Hp), jnp.bfloat16).at[:, :H].set(hidden.astype(jnp.bfloat16))

    call = _build_head_call(B, Hp, CP, L, tb, num_classes, vmem_limit_bytes)
    rep_p, logits_p, probs_p = call(h_p, w_p, b_p, wl_p, bl_p)
    return rep_p[:, :H], logits_p[:, :num_classes], probs_p[:, :num_classes]


def synthetic_transformer(input_ids, input_mask, emb_table, pooler_w, pooler_b):
    """Deterministic stand-in for AutoModel(...)[-1] (pooled output, [B, H])."""
    emb = emb_table[input_ids]                                   # [B, S, H]
    mask = input_mask[..., None].astype(jnp.float32)             # [B, S, 1]
    pooled = jnp.sum(emb * mask, axis=1) / jnp.maximum(jnp.sum(mask, axis=1), 1.0)
    return jnp.tanh(pooled @ pooler_w + pooler_b)                # [B, H]


if __name__ == "__main__":
    # Small, forward-consistent shapes.
    B, S, H = 16, 8, 32          # batch, seq_size, hidden_size
    num_layers = 2
    num_labels = 2
    C = num_labels + 1
    vocab = 101

    key = jax.random.PRNGKey(0)
    ks = jax.random.split(key, 8)

    # Inputs (deterministic).
    input_ids = jax.random.randint(ks[0], (B, S), 0, vocab, dtype=jnp.int32)
    input_mask = (jnp.arange(S)[None, :] <
                  (S // 2 + jnp.arange(B)[:, None] % (S // 2 + 1))).astype(jnp.float32)

    # Synthetic transformer params.
    emb_table = jax.random.normal(ks[1], (vocab, H), jnp.float32) * 0.02
    pooler_w = jax.random.normal(ks[2], (H, H), jnp.float32) * 0.02
    pooler_b = jnp.zeros((H,), jnp.float32)

    # Discriminator head params (weights stored [in, out]).
    w = jax.random.normal(ks[3], (num_layers, H, H), jnp.float32) * 0.05
    b = jax.random.normal(ks[4], (num_layers, 1, H), jnp.float32) * 0.01
    wl = jax.random.normal(ks[5], (H, C), jnp.float32) * 0.05
    bl = jax.random.normal(ks[6], (1, C), jnp.float32) * 0.01

    # One-time weight prep (model-load time, not per forward call).
    w_p, b_p, wl_p, bl_p = jax.block_until_ready(
        prepare_discriminator_params(w, b, wl, bl))

    hidden = synthetic_transformer(input_ids, input_mask, emb_table, pooler_w, pooler_b)

    head = jax.jit(bert_discriminator_head,
                   static_argnames=("hidden_size", "num_classes", "tb",
                                    "vmem_limit_bytes"))
    last_rep, logits, probs = head(hidden, w_p, b_p, wl_p, bl_p,
                                   hidden_size=H, num_classes=C)
    jax.block_until_ready((last_rep, logits, probs))

    # Cross-check against a plain-JAX f32 reference of the head.
    # (Tolerance relaxed because the kernel uses bf16 matmul operands.)
    def ref_head(x):
        for l in range(num_layers):
            x = x @ w[l] + b[l]
            x = jnp.where(x > 0, x, 0.2 * x)
        lg = x @ wl + bl
        return x, lg, jax.nn.softmax(lg, axis=-1)

    r_rep, r_logits, r_probs = ref_head(hidden)
    assert last_rep.shape == (B, H) and logits.shape == (B, C) and probs.shape == (B, C)
    assert jnp.allclose(last_rep, r_rep, atol=2e-2, rtol=2e-2)
    assert jnp.allclose(logits, r_logits, atol=2e-2, rtol=2e-2)
    assert jnp.allclose(probs, r_probs, atol=2e-2, rtol=2e-2)
    assert jnp.allclose(jnp.sum(probs, axis=-1), 1.0, atol=1e-4)

    print("KERNEL_OK")
</pallas_src>

<mosaic_0001>
module attributes {stable_mosaic.version = 11 : i64} {
  func.func @_disc_head_kernel(%arg0: i32, %arg1: memref<16x128xbf16, #tpu.memory_space<vmem>>, %arg2: memref<2x128x128xbf16, #tpu.memory_space<any>>, %arg3: memref<2x1x128xf32, #tpu.memory_space<any>>, %arg4: memref<128x128xbf16, #tpu.memory_space<any>>, %arg5: memref<1x128xf32, #tpu.memory_space<any>>, %arg6: memref<16x128xf32, #tpu.memory_space<vmem>>, %arg7: memref<16x128xf32, #tpu.memory_space<vmem>>, %arg8: memref<16x128xf32, #tpu.memory_space<vmem>>, %arg9: memref<2x128x128xbf16, #tpu.memory_space<vmem>>, %arg10: memref<2x1x128xf32, #tpu.memory_space<vmem>>, %arg11: memref<128x128xbf16, #tpu.memory_space<vmem>>, %arg12: memref<1x128xf32, #tpu.memory_space<vmem>>) attributes {dimension_semantics = [#tpu.dimension_semantics<arbitrary>], iteration_bounds = array<i64: 1>, scalar_prefetch = 0 : i64, scratch_operands = 4 : i64, tpu.core_type = #tpu.core_type<tc>, window_params = [{transform_indices = @transform_0, window_bounds = array<i64: 16, 128>}, {}, {}, {}, {}, {transform_indices = @transform_5, window_bounds = array<i64: 16, 128>}, {transform_indices = @transform_6, window_bounds = array<i64: 16, 128>}, {transform_indices = @transform_7, window_bounds = array<i64: 16, 128>}]} {
    %c0_i32 = arith.constant 0 : i32
    %0 = arith.cmpi eq, %arg0, %c0_i32 : i32
    %1 = arith.extui %0 : i1 to i32
    %c0_i32_0 = arith.constant 0 : i32
    %2 = arith.cmpi ne, %1, %c0_i32_0 : i32
    scf.if %2 {
      "tpu.region"() ({
        %48 = tpu.sem_alloc : memref<!tpu.dma_semaphore, #tpu.memory_space<semaphore_mem>>
        tpu.enqueue_dma source(%arg2 : memref<2x128x128xbf16, #tpu.memory_space<any>>) target(%arg9 : memref<2x128x128xbf16, #tpu.memory_space<vmem>>) target_semaphore(%48 : memref<!tpu.dma_semaphore, #tpu.memory_space<semaphore_mem>>)
        tpu.wait_dma2 semaphore(%48 : memref<!tpu.dma_semaphore, #tpu.memory_space<semaphore_mem>>) src(%arg2 : memref<2x128x128xbf16, #tpu.memory_space<any>>) dst(%arg9 : memref<2x128x128xbf16, #tpu.memory_space<vmem>>)
        tpu.yield
      }) : () -> ()
      "tpu.region"() ({
        %48 = tpu.sem_alloc : memref<!tpu.dma_semaphore, #tpu.memory_space<semaphore_mem>>
        tpu.enqueue_dma source(%arg3 : memref<2x1x128xf32, #tpu.memory_space<any>>) target(%arg10 : memref<2x1x128xf32, #tpu.memory_space<vmem>>) target_semaphore(%48 : memref<!tpu.dma_semaphore, #tpu.memory_space<semaphore_mem>>)
        tpu.wait_dma2 semaphore(%48 : memref<!tpu.dma_semaphore, #tpu.memory_space<semaphore_mem>>) src(%arg3 : memref<2x1x128xf32, #tpu.memory_space<any>>) dst(%arg10 : memref<2x1x128xf32, #tpu.memory_space<vmem>>)
        tpu.yield
      }) : () -> ()
      "tpu.region"() ({
        %48 = tpu.sem_alloc : memref<!tpu.dma_semaphore, #tpu.memory_space<semaphore_mem>>
        tpu.enqueue_dma source(%arg4 : memref<128x128xbf16, #tpu.memory_space<any>>) target(%arg11 : memref<128x128xbf16, #tpu.memory_space<vmem>>) target_semaphore(%48 : memref<!tpu.dma_semaphore, #tpu.memory_space<semaphore_mem>>)
        tpu.wait_dma2 semaphore(%48 : memref<!tpu.dma_semaphore, #tpu.memory_space<semaphore_mem>>) src(%arg4 : memref<128x128xbf16, #tpu.memory_space<any>>) dst(%arg11 : memref<128x128xbf16, #tpu.memory_space<vmem>>)
        tpu.yield
      }) : () -> ()
      "tpu.region"() ({
        %48 = tpu.sem_alloc : memref<!tpu.dma_semaphore, #tpu.memory_space<semaphore_mem>>
        tpu.enqueue_dma source(%arg5 : memref<1x128xf32, #tpu.memory_space<any>>) target(%arg12 : memref<1x128xf32, #tpu.memory_space<vmem>>) target_semaphore(%48 : memref<!tpu.dma_semaphore, #tpu.memory_space<semaphore_mem>>)
        tpu.wait_dma2 semaphore(%48 : memref<!tpu.dma_semaphore, #tpu.memory_space<semaphore_mem>>) src(%arg5 : memref<1x128xf32, #tpu.memory_space<any>>) dst(%arg12 : memref<1x128xf32, #tpu.memory_space<vmem>>)
        tpu.yield
      }) : () -> ()
    } else {
    }
    %c0 = arith.constant 0 : index
    %c0_1 = arith.constant 0 : index
    %3 = vector.load %arg1[%c0, %c0_1] : memref<16x128xbf16, #tpu.memory_space<vmem>>, vector<16x128xbf16>
    %c0_2 = arith.constant 0 : index
    %c0_3 = arith.constant 0 : index
    %c0_4 = arith.constant 0 : index
    %4 = vector.load %arg9[%c0_2, %c0_3, %c0_4] : memref<2x128x128xbf16, #tpu.memory_space<vmem>>, vector<1x128x128xbf16>
    %5 = vector.shape_cast %4 : vector<1x128x128xbf16> to vector<128x128xbf16>
    %cst = arith.constant dense<0.000000e+00> : vector<16x128xf32>
    %6 = tpu.matmul %3, %5, %cst {dimension_numbers = #tpu.dot_dimension_numbers<[1], [0], [0], [1], [0, 0, 1, 1], [], []>} : vector<16x128xbf16>, vector<128x128xbf16>, vector<16x128xf32> -> vector<16x128xf32>
    %c0_5 = arith.constant 0 : index
    %c0_6 = arith.constant 0 : index
    %c0_7 = arith.constant 0 : index
    %7 = vector.load %arg10[%c0_5, %c0_6, %c0_7] : memref<2x1x128xf32, #tpu.memory_space<vmem>>, vector<1x1x128xf32>
    %8 = vector.shape_cast %7 : vector<1x1x128xf32> to vector<1x128xf32>
    %9 = vector.broadcast %8 : vector<1x128xf32> to vector<16x128xf32>
    %10 = arith.addf %6, %9 : vector<16x128xf32>
    %cst_8 = arith.constant 2.000000e-01 : f32
    %11 = vector.broadcast %cst_8 : f32 to vector<16x128xf32>
    %12 = arith.mulf %11, %10 : vector<16x128xf32>
    %13 = arith.maximumf %10, %12 : vector<16x128xf32>
    %14 = arith.truncf %13 : vector<16x128xf32> to vector<16x128xbf16>
    %c1 = arith.constant 1 : index
    %c0_9 = arith.constant 0 : index
    %c0_10 = arith.constant 0 : index
    %15 = vector.load %arg9[%c1, %c0_9, %c0_10] : memref<2x128x128xbf16, #tpu.memory_space<vmem>>, vector<1x128x128xbf16>
    %16 = vector.shape_cast %15 : vector<1x128x128xbf16> to vector<128x128xbf16>
    %cst_11 = arith.constant dense<0.000000e+00> : vector<16x128xf32>
    %17 = tpu.matmul %14, %16, %cst_11 {dimension_numbers = #tpu.dot_dimension_numbers<[1], [0], [0], [1], [0, 0, 1, 1], [], []>} : vector<16x128xbf16>, vector<128x128xbf16>, vector<16x128xf32> -> vector<16x128xf32>
    %c1_12 = arith.constant 1 : index
    %c0_13 = arith.constant 0 : index
    %c0_14 = arith.constant 0 : index
    %18 = vector.load %arg10[%c1_12, %c0_13, %c0_14] : memref<2x1x128xf32, #tpu.memory_space<vmem>>, vector<1x1x128xf32>
    %19 = vector.shape_cast %18 : vector<1x1x128xf32> to vector<1x128xf32>
    %20 = vector.broadcast %19 : vector<1x128xf32> to vector<16x128xf32>
    %21 = arith.addf %17, %20 : vector<16x128xf32>
    %cst_15 = arith.constant 2.000000e-01 : f32
    %22 = vector.broadcast %cst_15 : f32 to vector<16x128xf32>
    %23 = arith.mulf %22, %21 : vector<16x128xf32>
    %24 = arith.maximumf %21, %23 : vector<16x128xf32>
    %c0_16 = arith.constant 0 : index
    %c0_17 = arith.constant 0 : index
    %25 = vector.load %arg6[%c0_16, %c0_17] : memref<16x128xf32, #tpu.memory_space<vmem>>, vector<16x128xf32>
    tpu.vector_store %arg6[%c0_16, %c0_17], %24 {strides = array<i32>} : memref<16x128xf32, #tpu.memory_space<vmem>>, vector<16x128xf32>,
    %26 = arith.truncf %24 : vector<16x128xf32> to vector<16x128xbf16>
    %c0_18 = arith.constant 0 : index
    %c0_19 = arith.constant 0 : index
    %27 = vector.load %arg11[%c0_18, %c0_19] : memref<128x128xbf16, #tpu.memory_space<vmem>>, vector<128x128xbf16>
    %cst_20 = arith.constant dense<0.000000e+00> : vector<16x128xf32>
    %28 = tpu.matmul %26, %27, %cst_20 {dimension_numbers = #tpu.dot_dimension_numbers<[1], [0], [0], [1], [0, 0, 1, 1], [], []>} : vector<16x128xbf16>, vector<128x128xbf16>, vector<16x128xf32> -> vector<16x128xf32>
    %c0_21 = arith.constant 0 : index
    %c0_22 = arith.constant 0 : index
    %29 = vector.load %arg12[%c0_21, %c0_22] : memref<1x128xf32, #tpu.memory_space<vmem>>, vector<1x128xf32>
    %30 = vector.broadcast %29 : vector<1x128xf32> to vector<16x128xf32>
    %31 = arith.addf %28, %30 : vector<16x128xf32>
    %c0_23 = arith.constant 0 : index
    %c0_24 = arith.constant 0 : index
    %32 = vector.load %arg7[%c0_23, %c0_24] : memref<16x128xf32, #tpu.memory_space<vmem>>, vector<16x128xf32>
    tpu.vector_store %arg7[%c0_23, %c0_24], %31 {strides = array<i32>} : memref<16x128xf32, #tpu.memory_space<vmem>>, vector<16x128xf32>,
    %33 = tpu.iota {dimensions = array<i32: 1>} : vector<16x128xi32>
    %c3_i32 = arith.constant 3 : i32
    %34 = vector.broadcast %c3_i32 : i32 to vector<16x128xi32>
    %35 = arith.cmpi slt, %33, %34 : vector<16x128xi32>
    %cst_25 = arith.constant 0xFF800000 : f32
    %36 = vector.broadcast %cst_25 : f32 to vector<16x128xf32>
    %37 = arith.select %35, %31, %36 : vector<16x128xi1>, vector<16x128xf32>
    %cst_26 = arith.constant dense<0xFF800000> : vector<16xf32>
    %38 = vector.multi_reduction <maximumf>, %37, %cst_26 [1] : vector<16x128xf32> to vector<16xf32>
    %39 = vector.shape_cast %38 : vector<16xf32> to vector<16x1xf32>
    %40 = vector.broadcast %39 : vector<16x1xf32> to vector<16x128xf32>
    %41 = arith.subf %37, %40 : vector<16x128xf32>
    %42 = math.exp %41 : vector<16x128xf32>
    %cst_27 = arith.constant dense<0.000000e+00> : vector<16xf32>
    %43 = vector.multi_reduction <add>, %42, %cst_27 [1] : vector<16x128xf32> to vector<16xf32>
    %44 = vector.shape_cast %43 : vector<16xf32> to vector<16x1xf32>
    %45 = vector.broadcast %44 : vector<16x1xf32> to vector<16x128xf32>
    %46 = arith.divf %42, %45 : vector<16x128xf32>
    %c0_28 = arith.constant 0 : index
    %c0_29 = arith.constant 0 : index
    %47 = vector.load %arg8[%c0_28, %c0_29] : memref<16x128xf32, #tpu.memory_space<vmem>>, vector<16x128xf32>
    tpu.vector_store %arg8[%c0_28, %c0_29], %46 {strides = array<i32>} : memref<16x128xf32, #tpu.memory_space<vmem>>, vector<16x128xf32>,
    return
  }
  func.func @transform_0(%arg0: i32) -> (i32, i32) {
    %c0_i32 = arith.constant 0 : i32
    %c0_i32_0 = arith.constant 0 : i32
    return %arg0, %c0_i32 : i32, i32
  }
  func.func @transform_5(%arg0: i32) -> (i32, i32) {
    %c0_i32 = arith.constant 0 : i32
    %c0_i32_0 = arith.constant 0 : i32
    return %arg0, %c0_i32 : i32, i32
  }
  func.func @transform_6(%arg0: i32) -> (i32, i32) {
    %c0_i32 = arith.constant 0 : i32
    %c0_i32_0 = arith.constant 0 : i32
    return %arg0, %c0_i32 : i32, i32
  }
  func.func @transform_7(%arg0: i32) -> (i32, i32) {
    %c0_i32 = arith.constant 0 : i32
    %c0_i32_0 = arith.constant 0 : i32
    return %arg0, %c0_i32 : i32, i32
  }
}

</mosaic_0001>

<llo_original>
// kernel: bert_discriminator_head.1
$region0: #{bert_discriminator_head.1}
  #allocation0 [shape = 'u32[]', space=smem, size = 0x4, offset = 0x4, fixed_abs, tag = 'smem constant byte address 0x4 - core index']
  #allocation1 [shape = 'u32[144,128]{1,0:T(1,128)}', space=vmem, size = 0x12000, scoped, tag = 'internal scratch']
  #allocation2 [shape = 'bf16[2,128,128]{2,1,0:T(16,128)(2,1)}', space=vmem, size = 0x10000, scoped, tag = 'scratch operand']
  #allocation3 [shape = 'f32[2,1,128]{2,1,0:T(1,128)}', space=vmem, size = 0x400, scoped, tag = 'scratch operand']
  #allocation4 [shape = 'bf16[128,128]{1,0:T(16,128)(2,1)}', space=vmem, size = 0x8000, scoped, tag = 'scratch operand']
  #allocation5 [shape = 'f32[1,128]{1,0:T(1,128)}', space=vmem, size = 0x200, scoped, tag = 'scratch operand']
  #allocation9 [shape = 's32[]', space=sflag, size = 0x4, offset = 0, fixed_abs, tag = 'sflag constant byte address 0x0 - dummy sync flag']
  #allocation10 [shape = 's32[]', space=sflag, size = 0x4, offset = 0, fixed_abs, tag = 'sflag constant byte address 0x0 - dummy sync flag']
  #allocation11 [shape = 'u32[]', space=smem, size = 0x4, offset = 0x44, fixed_abs, tag = 'smem constant byte address 0x44 - assertion arg 0']
  #allocation12 [shape = 'u32[]', space=smem, size = 0x4, offset = 0x48, fixed_abs, tag = 'smem constant byte address 0x48 - assertion arg 1']
  #allocation14 [shape = 's32[]', space=sflag, size = 0x4, offset = 0, fixed_abs, tag = 'sflag constant byte address 0x0 - dummy sync flag']
  #allocation16 [shape = 's32[]', space=sflag, size = 0x4, offset = 0, fixed_abs, tag = 'sflag constant byte address 0x0 - dummy sync flag']
  #allocation17 [shape = 's32[]', space=sflag, size = 0x4, offset = 0, fixed_abs, tag = 'sflag constant byte address 0x0 - dummy sync flag']
  #allocation19 [shape = 's32[]', space=sflag, size = 0x4, offset = 0, fixed_abs, tag = 'sflag constant byte address 0x0 - dummy sync flag']
  %s0 = inlined_call_operand.vmem [shape: bf16[16,128], index: 0, kind: input, shape index: {}]
  %s1 = inlined_call_operand.hbm [shape: bf16[2,128,128], index: 1, kind: input, shape index: {}]
  %s2 = inlined_call_operand.vmem [shape: f32[2,1,128], index: 2, kind: input, shape index: {}]
  %s3 = inlined_call_operand.hbm [shape: bf16[128,128], index: 3, kind: input, shape index: {}]
  %s4 = inlined_call_operand.vmem [shape: f32[1,128], index: 4, kind: input, shape index: {}]
  %s5 = inlined_call_operand.hbm [shape: f32[16,128], index: 5, kind: output, shape index: {0}]
  %s6 = inlined_call_operand.vmem [shape: f32[16,128], index: 6, kind: output, shape index: {1}]
  %s7 = inlined_call_operand.vmem [shape: f32[16,128], index: 7, kind: output, shape index: {2}]
  %8 = xla_tuple %s5, %s6, %s7
  %s9 = sld [smem:[#allocation0]]
  $region106: #{bert_discriminator_head.1} parent=0
    _
  %s11 = ssub.s32 1, %s9
  %s12 = scalar_select 0, %s11, %s9
  $region1: #{bert_discriminator_head.1} parent=0
    #allocation6 [shape = 'u8[8192]{0}', space=vmem, size = 0x2000, scoped, tag = 'output window, operand 0, single buffered']
    #allocation7 [shape = 's32[1]{0}', space=sflag, size = 0x4, scoped, tag = 'scoped memory for bert_discriminator_head.1']
    %13 = vsyncpa [#allocation7], 0
    // Predicated region
    $region2: #{bert_discriminator_head.1} parent=1 // pred_check
      _
    $region3: #{bert_discriminator_head.1} parent=1 // pred_check_branch
      %15 = sbr.rel (0) target = $region5
    $region4: #{bert_discriminator_head.1} parent=1 // pred_region
      _
    $region5: #{bert_discriminator_head.1} parent=1 // pred_fallthru
      _
    %p17 = scmp.eq.s32.totalorder 0, 0
    // Predicated region
    $region6: #{bert_discriminator_head.1} parent=1 // pred_check
      %p18 = pneg %p17
    $region7: #{bert_discriminator_head.1} parent=1 // pred_check_branch
      %20 = sbr.rel (%p18) target = $region9
    $region8: #{bert_discriminator_head.1} parent=1 // pred_region
      $region10: #{bert_discriminator_head.1} parent=8
        #allocation8 [shape = 's32[1]{0}', space=sflag, size = 0x4, scoped, tag = 'scoped memory for bert_discriminator_head.1']
        // Predicated region
        $region11: #{bert_discriminator_head.1} parent=10 // pred_check
          _
        $region12: #{bert_discriminator_head.1} parent=10 // pred_check_branch
          %22 = sbr.rel target = $region14
        $region13: #{bert_discriminator_head.1} parent=10 // pred_region
          %23 = sst [smem:[#allocation11]] [#allocation10]
          %24 = sst [smem:[#allocation12]] [#allocation9]
        $region14: #{bert_discriminator_head.1} parent=10 // pred_fallthru
          _
        %26 = shalt.err (0)
        %s28 = sshll.u32 [#allocation2], 4
        %s29 = int_to_ptr.vmem [resolvable:$true] %s28
        %31 = dma.hbm_to_vmem [thread:$0]  %s1, 2048, %s29, [#allocation8]
        %s32 = smul.u32 4, 2
        %s33 = smul.u32 %s32, 16
        %s34 = smul.u32 %s33, 1
        %s35 = sshll.u32 %s34, 4
        %36 = dma.done [#allocation8], %s35
      $region15: #{bert_discriminator_head.1} parent=8
        #allocation13 [shape = 's32[1]{0}', space=sflag, size = 0x4, scoped, tag = 'scoped memory for bert_discriminator_head.1']
        %p38 = scmp.lt.u32.totalorder 2, 8
        %p39 = pneg %p38
        // Predicated region
        $region16: #{bert_discriminator_head.1} parent=15 // pred_check
          _
        $region17: #{bert_discriminator_head.1} parent=15 // pred_check_branch
          %41 = sbr.rel (%p38) target = $region19
        $region18: #{bert_discriminator_head.1} parent=15 // pred_region
          %s56 = sand.u32 2, 7
          %p57 = scmp.eq.s32.totalorder %s56, 0
          %p58 = pneg %p57
          // Predicated region
          $region31: #{bert_discriminator_head.1} parent=18 // pred_check
            _
          $region32: #{bert_discriminator_head.1} parent=18 // pred_check_branch
            %60 = sbr.rel (%p57) target = $region34
          $region33: #{bert_discriminator_head.1} parent=18 // pred_region
            %s61 = sand.u32 2, 7
            %s62 = ssub.s32 2, %s61
            %s63 = scalar_lea.vmem %s2, %s62
            %s64 = ssub.s32 2, %s61
            %s65 = scalar_lea.vmem [#allocation3], %s64
            %s66 = sshllo.u32 0, %s61
            loop: start=0, step=1, limit=1
            $region35: #{bert_discriminator_head.1} parent=33 // loop_pre_header
              _
            $region36: #{bert_discriminator_head.1} parent=33 // loop_header
              %s68 = sphi 0, %s72
              %p69 = scmp.ge.s32.totalorder %s68, 1
              %s73 = sphi %s63, %s63
              %s74 = sphi %s65, %s65
            $region37: #{bert_discriminator_head.1} parent=33 // loop_header_branch
              %71 = sbr.rel (%p69) target = $region41
            $region38: #{bert_discriminator_head.1} parent=33 // loop_body
              %v75 = vld [vmem:[%s73] sm:%s66]
              %76 = vst [vmem:[%s74] sm:%s66] %v75
            $region39: #{bert_discriminator_head.1} parent=33 // loop_footer
              %s72 = sadd.s32 1, %s68
            $region40: #{bert_discriminator_head.1} parent=33 // loop_footer_branch
              %67 = sbr.rel target = $region36
            $region41: #{bert_discriminator_head.1} parent=33 // loop_exit
              _
          $region34: #{bert_discriminator_head.1} parent=18 // pred_fallthru
            _
        $region19: #{bert_discriminator_head.1} parent=15 // pred_fallthru
          _
        // Predicated region
        $region20: #{bert_discriminator_head.1} parent=15 // pred_check
          %p42 = pneg %p38
        $region21: #{bert_discriminator_head.1} parent=15 // pred_check_branch
          %44 = sbr.rel (%p42) target = $region23
        $region22: #{bert_discriminator_head.1} parent=15 // pred_region
          %s45 = sshllo.u32 0, 2
          loop: start=0, step=1, limit=1
          $region24: #{bert_discriminator_head.1} parent=22 // loop_pre_header
            _
          $region25: #{bert_discriminator_head.1} parent=22 // loop_header
            %s47 = sphi 0, %s51
            %p48 = scmp.ge.s32.totalorder %s47, 1
            %s52 = sphi %s2, %s2
            %s53 = sphi [#allocation3], [#allocation3]
          $region26: #{bert_discriminator_head.1} parent=22 // loop_header_branch
            %50 = sbr.rel (%p48) target = $region30
          $region27: #{bert_discriminator_head.1} parent=22 // loop_body
            %v54 = vld [vmem:[%s52] sm:%s45]
            %55 = vst [vmem:[%s53] sm:%s45] %v54
          $region28: #{bert_discriminator_head.1} parent=22 // loop_footer
            %s51 = sadd.s32 1, %s47
          $region29: #{bert_discriminator_head.1} parent=22 // loop_footer_branch
            %46 = sbr.rel target = $region25
          $region30: #{bert_discriminator_head.1} parent=22 // loop_exit
            _
        $region23: #{bert_discriminator_head.1} parent=15 // pred_fallthru
          _
        // Predicated region
        $region42: #{bert_discriminator_head.1} parent=15 // pred_check
          _
        $region43: #{bert_discriminator_head.1} parent=15 // pred_check_branch
          %79 = sbr.rel (0) target = $region45
        $region44: #{bert_discriminator_head.1} parent=15 // pred_region
          %80 = vsyncadd [#allocation13], 32
        $region45: #{bert_discriminator_head.1} parent=15 // pred_fallthru
          _
        %s81 = smul.u32 2, 1
        %s82 = smul.u32 %s81, 1
        %s83 = sshll.u32 %s82, 4
        %84 = dma.done [#allocation13], %s83
      $region46: #{bert_discriminator_head.1} parent=8
        #allocation15 [shape = 's32[1]{0}', space=sflag, size = 0x4, scoped, tag = 'scoped memory for bert_discriminator_head.1']
        // Predicated region
        $region47: #{bert_discriminator_head.1} parent=46 // pred_check
          _
        $region48: #{bert_discriminator_head.1} parent=46 // pred_check_branch
          %86 = sbr.rel target = $region50
        $region49: #{bert_discriminator_head.1} parent=46 // pred_region
          %87 = sst [smem:[#allocation11]] [#allocation17]
          %88 = sst [smem:[#allocation12]] [#allocation16]
        $region50: #{bert_discriminator_head.1} parent=46 // pred_fallthru
          _
        %90 = shalt.err (0)
        %s92 = sshll.u32 [#allocation4], 4
        %s93 = int_to_ptr.vmem [resolvable:$true] %s92
        %95 = dma.hbm_to_vmem [thread:$0]  %s3, 1024, %s93, [#allocation15]
        %s96 = smul.u32 4, 16
        %s97 = smul.u32 %s96, 1
        %s98 = sshll.u32 %s97, 4
        %99 = dma.done [#allocation15], %s98
      $region51: #{bert_discriminator_head.1} parent=8
        #allocation18 [shape = 's32[1]{0}', space=sflag, size = 0x4, scoped, tag = 'scoped memory for bert_discriminator_head.1']
        %p101 = scmp.lt.u32.totalorder 1, 8
        %p102 = pneg %p101
        // Predicated region
        $region52: #{bert_discriminator_head.1} parent=51 // pred_check
          _
        $region53: #{bert_discriminator_head.1} parent=51 // pred_check_branch
          %104 = sbr.rel (%p101) target = $region55
        $region54: #{bert_discriminator_head.1} parent=51 // pred_region
          %s119 = sand.u32 1, 7
          %p120 = scmp.eq.s32.totalorder %s119, 0
          %p121 = pneg %p120
          // Predicated region
          $region67: #{bert_discriminator_head.1} parent=54 // pred_check
            _
          $region68: #{bert_discriminator_head.1} parent=54 // pred_check_branch
            %123 = sbr.rel (%p120) target = $region70
          $region69: #{bert_discriminator_head.1} parent=54 // pred_region
            %s124 = sand.u32 1, 7
            %s125 = ssub.s32 1, %s124
            %s126 = scalar_lea.vmem %s4, %s125
            %s127 = ssub.s32 1, %s124
            %s128 = scalar_lea.vmem [#allocation5], %s127
            %s129 = sshllo.u32 0, %s124
            loop: start=0, step=1, limit=1
            $region71: #{bert_discriminator_head.1} parent=69 // loop_pre_header
              _
            $region72: #{bert_discriminator_head.1} parent=69 // loop_header
              %s131 = sphi 0, %s135
              %p132 = scmp.ge.s32.totalorder %s131, 1
              %s136 = sphi %s126, %s126
              %s137 = sphi %s128, %s128
            $region73: #{bert_discriminator_head.1} parent=69 // loop_header_branch
              %134 = sbr.rel (%p132) target = $region77
            $region74: #{bert_discriminator_head.1} parent=69 // loop_body
              %v138 = vld [vmem:[%s136] sm:%s129]
              %139 = vst [vmem:[%s137] sm:%s129] %v138
            $region75: #{bert_discriminator_head.1} parent=69 // loop_footer
              %s135 = sadd.s32 1, %s131
            $region76: #{bert_discriminator_head.1} parent=69 // loop_footer_branch
              %130 = sbr.rel target = $region72
            $region77: #{bert_discriminator_head.1} parent=69 // loop_exit
              _
          $region70: #{bert_discriminator_head.1} parent=54 // pred_fallthru
            _
        $region55: #{bert_discriminator_head.1} parent=51 // pred_fallthru
          _
        // Predicated region
        $region56: #{bert_discriminator_head.1} parent=51 // pred_check
          %p105 = pneg %p101
        $region57: #{bert_discriminator_head.1} parent=51 // pred_check_branch
          %107 = sbr.rel (%p105) target = $region59
        $region58: #{bert_discriminator_head.1} parent=51 // pred_region
          %s108 = sshllo.u32 0, 1
          loop: start=0, step=1, limit=1
          $region60: #{bert_discriminator_head.1} parent=58 // loop_pre_header
            _
          $region61: #{bert_discriminator_head.1} parent=58 // loop_header
            %s110 = sphi 0, %s114
            %p111 = scmp.ge.s32.totalorder %s110, 1
            %s115 = sphi %s4, %s4
            %s116 = sphi [#allocation5], [#allocation5]
          $region62: #{bert_discriminator_head.1} parent=58 // loop_header_branch
            %113 = sbr.rel (%p111) target = $region66
          $region63: #{bert_discriminator_head.1} parent=58 // loop_body
            %v117 = vld [vmem:[%s115] sm:%s108]
            %118 = vst [vmem:[%s116] sm:%s108] %v117
          $region64: #{bert_discriminator_head.1} parent=58 // loop_footer
            %s114 = sadd.s32 1, %s110
          $region65: #{bert_discriminator_head.1} parent=58 // loop_footer_branch
            %109 = sbr.rel target = $region61
          $region66: #{bert_discriminator_head.1} parent=58 // loop_exit
            _
        $region59: #{bert_discriminator_head.1} parent=51 // pred_fallthru
          _
        // Predicated region
        $region78: #{bert_discriminator_head.1} parent=51 // pred_check
          _
        $region79: #{bert_discriminator_head.1} parent=51 // pred_check_branch
          %142 = sbr.rel (0) target = $region81
        $region80: #{bert_discriminator_head.1} parent=51 // pred_region
          %143 = vsyncadd [#allocation18], 16
        $region81: #{bert_discriminator_head.1} parent=51 // pred_fallthru
          _
        %s144 = smul.u32 1, 1
        %s145 = sshll.u32 %s144, 4
        %146 = dma.done [#allocation18], %s145
    $region9: #{bert_discriminator_head.1} parent=1 // pred_fallthru
      _
    %v147 = vld [vmem:[%s0] sm:$0xf]
    %v148 = vld [vmem:[%s0 + $0x4] sm:$0xf]
    %v149 = vld [vmem:[#allocation2] sm:$0xff]
    %v150 = vld [vmem:[#allocation2 + $0x8] sm:$0xff]
    %v151 = vld [vmem:[#allocation2 + $0x10] sm:$0xff]
    %v152 = vld [vmem:[#allocation2 + $0x18] sm:$0xff]
    %v153 = vld [vmem:[#allocation2 + $0x20] sm:$0xff]
    %v154 = vld [vmem:[#allocation2 + $0x28] sm:$0xff]
    %v155 = vld [vmem:[#allocation2 + $0x30] sm:$0xff]
    %v156 = vld [vmem:[#allocation2 + $0x38] sm:$0xff]
    %v157 = vld [vmem:[#allocation3] sm:$0x1]
    %v159 = vlaneseq
    %v160 = vshrl.u32 %v159, 7
    %v161 = vsub.s32 0, %v160
    %v162 = vrot.slane %v157, %v161
    %v166 = vunpack.c.l.b16 %v147
    %v167 = vunpack.c.l.b16 %v148
    %v168 = vpack.c.b16 %v167, %v166
    %170 = vmatprep.subr.bf16.mxu0 0
    %171 = vmatpush1.bf16.msra.mxu0 %v149
    %172 = vmatprep.subr.bf16.mxu0 0
    %173 = vmatpush1.bf16.msra.mxu0 %v150
    %174 = vmatprep.subr.bf16.mxu0 0
    %175 = vmatpush1.bf16.msra.mxu0 %v151
    %176 = vmatprep.subr.bf16.mxu0 0
    %177 = vmatpush1.bf16.msra.mxu0 %v152
    %178 = vmatprep.subr.bf16.mxu0 0
    %179 = vmatpush1.bf16.msra.mxu0 %v153
    %180 = vmatprep.subr.bf16.mxu0 0
    %181 = vmatpush1.bf16.msra.mxu0 %v154
    %182 = vmatprep.subr.bf16.mxu0 0
    %183 = vmatpush1.bf16.msra.mxu0 %v155
    %184 = vmatprep.subr.bf16.mxu0 0
    %185 = vmatpush1.bf16.msra.mxu0 %v156
    %186 = vmatprep.subr.bf16.mxu0 0
    %187 = vmatpush1.bf16.msra.mxu0 0
    %188 = vmatprep.subr.bf16.mxu0 0
    %189 = vmatpush1.bf16.msra.mxu0 0
    %190 = vmatprep.subr.bf16.mxu0 0
    %191 = vmatpush1.bf16.msra.mxu0 0
    %192 = vmatprep.subr.bf16.mxu0 0
    %193 = vmatpush1.bf16.msra.mxu0 0
    %194 = vmatprep.subr.bf16.mxu0 0
    %195 = vmatpush1.bf16.msra.mxu0 0
    %196 = vmatprep.subr.bf16.mxu0 0
    %197 = vmatpush1.bf16.msra.mxu0 0
    %198 = vmatprep.subr.bf16.mxu0 0
    %199 = vmatpush1.bf16.msra.mxu0 0
    %200 = vmatprep.subr.bf16.mxu0 0
    %201 = vmatpush1.bf16.msra.mxu0 0
    %202 = vmatprep.mubr.bf16.mxu0 0
    %203 = vmatmul.mubr.bf16.gmra.mrb[0].mxu0 %v168
    %v204 = vpop.f32.mrb[0].mxu0
    %v205 = vadd.f32 %v162, %v204
    %v206 = vpop.f32.mrb[0].mxu0
    %v207 = vpop.f32.mrb[0].mxu0
    %v208 = vadd.f32 %v162, %v207
    %v209 = vpop.f32.mrb[0].mxu0
    %210 = vdwg.mxu0
    %v211 = vmul.f32 %v205, 0.2
    %v212 = vmul.f32 %v208, 0.2
    %v213 = vmax.f32 %v205, %v211
    %v214 = vmax.f32 %v208, %v212
    %v215 = vpack.c.bf16 %v214, %v213
    %s216 = scalar_lea.vmem [#allocation2], 64
    %v217 = vld [vmem:[%s216] sm:$0xff]
    %v218 = vld [vmem:[%s216 + $0x8] sm:$0xff]
    %v219 = vld [vmem:[%s216 + $0x10] sm:$0xff]
    %v220 = vld [vmem:[%s216 + $0x18] sm:$0xff]
    %v221 = vld [vmem:[%s216 + $0x20] sm:$0xff]
    %v222 = vld [vmem:[%s216 + $0x28] sm:$0xff]
    %v223 = vld [vmem:[%s216 + $0x30] sm:$0xff]
    %v224 = vld [vmem:[%s216 + $0x38] sm:$0xff]
    %s225 = scalar_lea.vmem [#allocation3], 1
    %v226 = vld [vmem:[%s225] sm:$0x1]
    %v228 = vlaneseq
    %v229 = vshrl.u32 %v228, 7
    %v230 = vsub.s32 0, %v229
    %v231 = vrot.slane %v226, %v230
    %233 = vmatprep.subr.bf16.mxu0 0
    %234 = vmatpush1.bf16.msra.mxu0 %v217
    %235 = vmatprep.subr.bf16.mxu0 0
    %236 = vmatpush1.bf16.msra.mxu0 %v218
    %237 = vmatprep.subr.bf16.mxu0 0
    %238 = vmatpush1.bf16.msra.mxu0 %v219
    %239 = vmatprep.subr.bf16.mxu0 0
    %240 = vmatpush1.bf16.msra.mxu0 %v220
    %241 = vmatprep.subr.bf16.mxu0 0
    %242 = vmatpush1.bf16.msra.mxu0 %v221
    %243 = vmatprep.subr.bf16.mxu0 0
    %244 = vmatpush1.bf16.msra.mxu0 %v222
    %245 = vmatprep.subr.bf16.mxu0 0
    %246 = vmatpush1.bf16.msra.mxu0 %v223
    %247 = vmatprep.subr.bf16.mxu0 0
    %248 = vmatpush1.bf16.msra.mxu0 %v224
    %249 = vmatprep.subr.bf16.mxu0 0
    %250 = vmatpush1.bf16.msra.mxu0 0
    %251 = vmatprep.subr.bf16.mxu0 0
    %252 = vmatpush1.bf16.msra.mxu0 0
    %253 = vmatprep.subr.bf16.mxu0 0
    %254 = vmatpush1.bf16.msra.mxu0 0
    %255 = vmatprep.subr.bf16.mxu0 0
    %256 = vmatpush1.bf16.msra.mxu0 0
    %257 = vmatprep.subr.bf16.mxu0 0
    %258 = vmatpush1.bf16.msra.mxu0 0
    %259 = vmatprep.subr.bf16.mxu0 0
    %260 = vmatpush1.bf16.msra.mxu0 0
    %261 = vmatprep.subr.bf16.mxu0 0
    %262 = vmatpush1.bf16.msra.mxu0 0
    %263 = vmatprep.subr.bf16.mxu0 0
    %264 = vmatpush1.bf16.msra.mxu0 0
    %265 = vmatprep.mubr.bf16.mxu0 0
    %266 = vmatmul.mubr.bf16.gmra.mrb[0].mxu0 %v215
    %v267 = vpop.f32.mrb[0].mxu0
    %v268 = vadd.f32 %v231, %v267
    %v269 = vpop.f32.mrb[0].mxu0
    %v270 = vpop.f32.mrb[0].mxu0
    %v271 = vadd.f32 %v231, %v270
    %v272 = vpop.f32.mrb[0].mxu0
    %273 = vdwg.mxu0
    %v274 = vmul.f32 %v268, 0.2
    %v275 = vmul.f32 %v271, 0.2
    %v276 = vmax.f32 %v268, %v274
    %v277 = vmax.f32 %v271, %v275
    %278 = vst [vmem:[#allocation6] sm:$0xff] %v276
    %279 = vst [vmem:[#allocation6 + $0x8] sm:$0xff] %v277
    %v280 = vpack.c.bf16 %v277, %v276
    %v281 = vld [vmem:[#allocation4] sm:$0xff]
    %v282 = vld [vmem:[#allocation4 + $0x8] sm:$0xff]
    %v283 = vld [vmem:[#allocation4 + $0x10] sm:$0xff]
    %v284 = vld [vmem:[#allocation4 + $0x18] sm:$0xff]
    %v285 = vld [vmem:[#allocation4 + $0x20] sm:$0xff]
    %v286 = vld [vmem:[#allocation4 + $0x28] sm:$0xff]
    %v287 = vld [vmem:[#allocation4 + $0x30] sm:$0xff]
    %v288 = vld [vmem:[#allocation4 + $0x38] sm:$0xff]
    %v289 = vld [vmem:[#allocation5] sm:$0x1]
    %v291 = vlaneseq
    %v292 = vshrl.u32 %v291, 7
    %v293 = vsub.s32 0, %v292
    %v294 = vrot.slane %v289, %v293
    %296 = vmatprep.subr.bf16.mxu0 0
    %297 = vmatpush1.bf16.msra.mxu0 %v281
    %298 = vmatprep.subr.bf16.mxu0 0
    %299 = vmatpush1.bf16.msra.mxu0 %v282
    %300 = vmatprep.subr.bf16.mxu0 0
    %301 = vmatpush1.bf16.msra.mxu0 %v283
    %302 = vmatprep.subr.bf16.mxu0 0
    %303 = vmatpush1.bf16.msra.mxu0 %v284
    %304 = vmatprep.subr.bf16.mxu0 0
    %305 = vmatpush1.bf16.msra.mxu0 %v285
    %306 = vmatprep.subr.bf16.mxu0 0
    %307 = vmatpush1.bf16.msra.mxu0 %v286
    %308 = vmatprep.subr.bf16.mxu0 0
    %309 = vmatpush1.bf16.msra.mxu0 %v287
    %310 = vmatprep.subr.bf16.mxu0 0
    %311 = vmatpush1.bf16.msra.mxu0 %v288
    %312 = vmatprep.subr.bf16.mxu0 0
    %313 = vmatpush1.bf16.msra.mxu0 0
    %314 = vmatprep.subr.bf16.mxu0 0
    %315 = vmatpush1.bf16.msra.mxu0 0
    %316 = vmatprep.subr.bf16.mxu0 0
    %317 = vmatpush1.bf16.msra.mxu0 0
    %318 = vmatprep.subr.bf16.mxu0 0
    %319 = vmatpush1.bf16.msra.mxu0 0
    %320 = vmatprep.subr.bf16.mxu0 0
    %321 = vmatpush1.bf16.msra.mxu0 0
    %322 = vmatprep.subr.bf16.mxu0 0
    %323 = vmatpush1.bf16.msra.mxu0 0
    %324 = vmatprep.subr.bf16.mxu0 0
    %325 = vmatpush1.bf16.msra.mxu0 0
    %326 = vmatprep.subr.bf16.mxu0 0
    %327 = vmatpush1.bf16.msra.mxu0 0
    %328 = vmatprep.mubr.bf16.mxu0 0
    %329 = vmatmul.mubr.bf16.gmra.mrb[0].mxu0 %v280
    %v330 = vpop.f32.mrb[0].mxu0
    %v331 = vadd.f32 %v294, %v330
    %v332 = vpop.f32.mrb[0].mxu0
    %v333 = vpop.f32.mrb[0].mxu0
    %v334 = vadd.f32 %v294, %v333
    %v335 = vpop.f32.mrb[0].mxu0
    %336 = vdwg.mxu0
    %337 = vst [vmem:[%s6] sm:$0xff] %v331
    %338 = vst [vmem:[%s6 + $0x8] sm:$0xff] %v334
    %v339 = vlaneseq
    %v340 = vand.u32 %v339, 127
    %vm341 = vcmp.lt.s32.totalorder %v340, 3
    %v342 = vsel %vm341, %v331, -inf
    %v343 = vsel %vm341, %v334, -inf
    %344 = vmax.xlane.f32.xlu0 %v342
    %v345 = vpop.xlane.xlu0 %344
    %346 = vmax.xlane.f32.xlu0 %v343
    %v347 = vpop.xlane.xlu0 %346
    %v348 = vsub.f32 %v342, %v345
    %v349 = vsub.f32 %v343, %v347
    %v350 = vmul.f32 %v348, 1.442695
    %v351 = vpow.pop %v350
    %v352 = vmul.f32 %v349, 1.442695
    %v353 = vpow.pop %v352
    %354 = vadd.xlane.f32.xlu0 %v351
    %v355 = vpop.xlane.xlu0 %354
    %356 = vadd.xlane.f32.xlu0 %v353
    %v357 = vpop.xlane.xlu0 %356
    %v358 = vrcp.pop %v355
    %v359 = vmul.f32 %v351, %v358
    %v360 = vrcp.pop %v357
    %v361 = vmul.f32 %v353, %v360
    %362 = vst [vmem:[%s7] sm:$0xff] %v359
    %363 = vst [vmem:[%s7 + $0x8] sm:$0xff] %v361
    // Predicated region
    $region82: #{bert_discriminator_head.1} parent=1 // pred_check
      _
    $region83: #{bert_discriminator_head.1} parent=1 // pred_check_branch
      %365 = sbr.rel (0) target = $region85
    $region84: #{bert_discriminator_head.1} parent=1 // pred_region
      %s367 = ssub.s32 256, 256
      %368 = vsyncadd [#allocation7], %s367
      %s369 = sshll.u32 [#allocation6], 4
      %s370 = int_to_ptr.vmem [resolvable:$true] %s369
      %375 = dma.vmem_to_hbm [thread:$0]  %s370, 256, %s5, [#allocation7], 128, 128, 8
    $region85: #{bert_discriminator_head.1} parent=1 // pred_fallthru
      _
    // Predicated region
    $region86: #{bert_discriminator_head.1} parent=1 // pred_check
      _
    $region87: #{bert_discriminator_head.1} parent=1 // pred_check_branch
      %377 = sbr.rel (0) target = $region89
    $region88: #{bert_discriminator_head.1} parent=1 // pred_region
      _
    $region89: #{bert_discriminator_head.1} parent=1 // pred_fallthru
      _
    // Predicated region
    $region90: #{bert_discriminator_head.1} parent=1 // pred_check
      _
    $region91: #{bert_discriminator_head.1} parent=1 // pred_check_branch
      %379 = sbr.rel (0) target = $region93
    $region92: #{bert_discriminator_head.1} parent=1 // pred_region
      _
    $region93: #{bert_discriminator_head.1} parent=1 // pred_fallthru
      _
    // Predicated region
    $region94: #{bert_discriminator_head.1} parent=1 // pred_check
      _
    $region95: #{bert_discriminator_head.1} parent=1 // pred_check_branch
      %381 = sbr.rel (0) target = $region97
    $region96: #{bert_discriminator_head.1} parent=1 // pred_region
      %382 = dma.done [#allocation7], 256
    $region97: #{bert_discriminator_head.1} parent=1 // pred_fallthru
      _
    // Predicated region
    $region98: #{bert_discriminator_head.1} parent=1 // pred_check
      _
    $region99: #{bert_discriminator_head.1} parent=1 // pred_check_branch
      %384 = sbr.rel (0) target = $region101
    $region100: #{bert_discriminator_head.1} parent=1 // pred_region
      _
    $region101: #{bert_discriminator_head.1} parent=1 // pred_fallthru
      _
    // Predicated region
    $region102: #{bert_discriminator_head.1} parent=1 // pred_check
      _
    $region103: #{bert_discriminator_head.1} parent=1 // pred_check_branch
      %386 = sbr.rel (0) target = $region105
    $region104: #{bert_discriminator_head.1} parent=1 // pred_region
      _
    $region105: #{bert_discriminator_head.1} parent=1 // pred_fallthru
      _
    %387 = vsyncpa [#allocation7], 1

</llo_original>
